<compile_context>
chip_gen: v7x
topology: tpu7x:2x2x1
jax: 0.10.0
libtpu: 0.0.40
codegen_flags: <defaults>
</compile_context>

<pallas_src>
import functools

import jax
import jax.numpy as jnp
from jax.experimental import pallas as pl
from jax.experimental.pallas import tpu as pltpu

LANES = 128
SUBLANES = 8
MAX_TILE_ROWS = 4096        # 4096 x 128 x 4B = 2 MiB / block / input (f32)
MIN_PALLAS_ELEMS = 1 << 17  # below this, plain fused XLA is faster


def _num_tensorcores():
    """Best-effort TensorCore count (2 on v7x, 1 on v5e/v6e). Defaults to 1."""
    try:
        info = pltpu.get_tpu_info()
        for attr in ("num_cores", "num_tensorcores", "tensorcores_per_chip",
                     "cores_per_chip", "core_count"):
            v = getattr(info, attr, None)
            if isinstance(v, int) and 1 <= v <= 8:
                return v
    except Exception:
        pass
    return 1


def _link_loss_kernel(p_ref, y_ref, m_ref, num_ref, den_ref, *,
                      tile_rows, blocks_per_shard, nblocks, valid_rows,
                      need_mask):
    i = pl.program_id(1)

    # Output blocks are resident accumulators across the inner axis:
    # zero them at the start of each shard's inner loop.
    @pl.when(i == 0)
    def _init():
        num_ref[...] = jnp.zeros_like(num_ref)
        den_ref[...] = jnp.zeros_like(den_ref)

    # Native-dtype DMA; upcast to f32 in-kernel (v5e VPU has no bf16 ops) and
    # accumulate in f32.
    p = p_ref[...].astype(jnp.float32)
    y = y_ref[...].astype(jnp.float32)
    m = m_ref[...].astype(jnp.float32)
    absdiff = jnp.abs((p - y) * m)

    def fold(x):
        # (T, 128) -> (8, 128): reshape along the sublane tiling (free) then
        # sum over the leading axis = vreg-wise VPU adds, no XLU reduce.
        return x.reshape(tile_rows // SUBLANES, SUBLANES, LANES).sum(axis=0)

    if not need_mask:
        num_ref[...] += fold(absdiff)
        den_ref[...] += fold(m)
    else:
        blk = pl.program_id(0) * blocks_per_shard + i   # unclamped block index
        last_real = nblocks - 1

        @pl.when(blk < last_real)
        def _fast():   # interior blocks: no masking cost
            num_ref[...] += fold(absdiff)
            den_ref[...] += fold(m)

        @pl.when(blk >= last_real)
        def _edge():   # ragged tail and/or clamped (repeated) block
            row0 = blk * tile_rows
            row_ids = row0 + jax.lax.broadcasted_iota(
                jnp.int32, (tile_rows, 1), 0)
            valid = row_ids < valid_rows
            zeros = jnp.zeros_like(absdiff)
            # Mask both operands: OOB rows may hold garbage (NaN * 0 == NaN).
            num_ref[...] += fold(jnp.where(valid, absdiff, zeros))
            den_ref[...] += fold(jnp.where(valid, m, zeros))


def _canon(x):
    """Keep f32/bf16 native (no host upcast); anything else -> f32."""
    if x.dtype == jnp.float32 or x.dtype == jnp.bfloat16:
        return x
    return x.astype(jnp.float32)


def _to_rows(x, rows):
    """Flatten to (rows, 128) in native dtype; pads (copy) only when needed."""
    flat = jnp.ravel(x)
    pad = rows * LANES - flat.shape[0]
    if pad:
        flat = jnp.pad(flat, (0, pad))
    return flat.reshape(rows, LANES)


def link_loss(pred_y, label_y, mask, *,
              min_pallas_elems=MIN_PALLAS_ELEMS,
              max_tile_rows=MAX_TILE_ROWS):
    n = pred_y.size

    # Tiny inputs: launch + single-step grid overhead dominates -> fused XLA.
    if n < min_pallas_elems:
        p = pred_y.astype(jnp.float32)
        y = label_y.astype(jnp.float32)
        m = mask.astype(jnp.float32)
        return jnp.sum(jnp.abs((p - y) * m)) / jnp.sum(m)

    inputs = [_canon(pred_y), _canon(label_y), _canon(mask)]

    # Sublane alignment: 8 rows for 4-byte dtypes, 16 for 2-byte (bf16).
    align = max(16 if jnp.dtype(x.dtype).itemsize == 2 else SUBLANES
                for x in inputs)

    # Minimal alignment only: when n % (align*128) == 0 this is a free reshape.
    rows = pl.cdiv(n, LANES)
    rows = ((rows + align - 1) // align) * align
    p2, y2, m2 = (_to_rows(x, rows) for x in inputs)

    tile_rows = min(max_tile_rows, rows)
    nblocks = pl.cdiv(rows, tile_rows)

    cores = _num_tensorcores()
    shards = cores if (cores > 1 and nblocks >= cores) else 1
    blocks_per_shard = pl.cdiv(nblocks, shards)

    clamp = (blocks_per_shard * shards) != nblocks
    need_mask = clamp or (rows % tile_rows) != 0

    def in_map(s, i):
        b = s * blocks_per_shard + i
        if clamp:
            # Keep the DMA in-bounds; masked to zero in the kernel anyway.
            b = jnp.minimum(b, nblocks - 1)
        return (b, 0)

    in_spec = pl.BlockSpec((tile_rows, LANES), in_map)
    out_spec = pl.BlockSpec((None, SUBLANES, LANES), lambda s, i: (s, 0, 0))

    kernel = functools.partial(
        _link_loss_kernel,
        tile_rows=tile_rows,
        blocks_per_shard=blocks_per_shard,
        nblocks=nblocks,
        valid_rows=rows,
        need_mask=need_mask,
    )

    partial_shape = jax.ShapeDtypeStruct((shards, SUBLANES, LANES), jnp.float32)
    in_bytes = sum(int(jnp.dtype(x.dtype).itemsize) * rows * LANES
                   for x in (p2, y2, m2))
    cost = pl.CostEstimate(
        flops=5 * n,
        transcendentals=0,
        bytes_accessed=in_bytes + 2 * shards * SUBLANES * LANES * 4,
    )

    dims = ((pltpu.CORE_PARALLEL, pltpu.ARBITRARY) if shards > 1
            else ("arbitrary", "arbitrary"))

    num_p, den_p = pl.pallas_call(
        kernel,
        out_shape=(partial_shape, partial_shape),
        grid_spec=pltpu.PrefetchScalarGridSpec(
            num_scalar_prefetch=0,
            grid=(shards, blocks_per_shard),
            in_specs=[in_spec, in_spec, in_spec],
            out_specs=(out_spec, out_spec),
        ),
        compiler_params=pltpu.CompilerParams(dimension_semantics=dims),
        cost_estimate=cost,
    )(p2, y2, m2)

    # Tiny final cross-lane reduction and the division stay in plain JAX.
    return jnp.sum(num_p) / jnp.sum(den_p)


def _reference(pred_y, label_y, mask):
    p = pred_y.astype(jnp.float32)
    y = label_y.astype(jnp.float32)
    m = mask.astype(jnp.float32)
    return jnp.sum(jnp.abs((p - y) * m)) / jnp.sum(m)


if __name__ == "__main__":
    key = jax.random.PRNGKey(0)
    k1, k2, k3 = jax.random.split(key, 3)

    def make(shape, dtype=jnp.float32):
        p = jax.random.normal(k1, shape, dtype=jnp.float32).astype(dtype)
        y = jax.random.normal(k2, shape, dtype=jnp.float32).astype(dtype)
        m = jax.random.uniform(k3, shape, dtype=jnp.float32)
        return p, y, m

    # 1) Small NCHW input (typical module use) -> fused-XLA fallback path.
    p, y, m = make((2, 4, 16, 16))
    out = jax.block_until_ready(link_loss(p, y, m))
    ref = _reference(p, y, m)
    assert jnp.allclose(out, ref, rtol=1e-5, atol=1e-6), ("fallback", out, ref)

    # 2) Same small input forced through the Pallas path (aligned, 1 block).
    out = jax.block_until_ready(link_loss(p, y, m, min_pallas_elems=0))
    assert jnp.allclose(out, ref, rtol=1e-5, atol=1e-6), ("pallas", out, ref)

    # 3) Ragged, multi-block case (exercises the pl.when edge-mask path).
    p, y, m = make((2, 4, 16, 18))
    out = jax.block_until_ready(
        link_loss(p, y, m, min_pallas_elems=0, max_tile_rows=16))
    ref = _reference(p, y, m)
    assert jnp.allclose(out, ref, rtol=1e-5, atol=1e-6), ("ragged", out, ref)

    # 4) bf16 pred/label + f32 mask: native-dtype DMA, f32 accumulation.
    p, y, m = make((2, 4, 64, 64), dtype=jnp.bfloat16)
    out = jax.block_until_ready(link_loss(p, y, m, min_pallas_elems=0))
    ref = _reference(p, y, m)
    assert jnp.allclose(out, ref, rtol=1e-3, atol=1e-5), ("bf16", out, ref)

    print("KERNEL_OK")
</pallas_src>

<mosaic_0001>
module attributes {stable_mosaic.version = 11 : i64} {
  func.func @_link_loss_kernel(%arg0: i32, %arg1: i32, %arg2: memref<16x128xf32, #tpu.memory_space<vmem>>, %arg3: memref<16x128xf32, #tpu.memory_space<vmem>>, %arg4: memref<16x128xf32, #tpu.memory_space<vmem>>, %arg5: memref<1x8x128xf32, #tpu.memory_space<vmem>>, %arg6: memref<1x8x128xf32, #tpu.memory_space<vmem>>) attributes {dimension_semantics = [#tpu.dimension_semantics<arbitrary>, #tpu.dimension_semantics<arbitrary>], iteration_bounds = array<i64: 1, 1>, scalar_prefetch = 0 : i64, scratch_operands = 0 : i64, tpu.core_type = #tpu.core_type<tc>, window_params = [{transform_indices = @transform_0, window_bounds = array<i64: 16, 128>}, {transform_indices = @transform_1, window_bounds = array<i64: 16, 128>}, {transform_indices = @transform_2, window_bounds = array<i64: 16, 128>}, {transform_indices = @transform_3, window_bounds = array<i64: 1, 8, 128>}, {transform_indices = @transform_4, window_bounds = array<i64: 1, 8, 128>}]} {
    %c0_i32 = arith.constant 0 : i32
    %0 = arith.cmpi eq, %arg1, %c0_i32 : i32
    %1 = arith.extui %0 : i1 to i32
    %c0_i32_0 = arith.constant 0 : i32
    %2 = arith.cmpi ne, %1, %c0_i32_0 : i32
    scf.if %2 {
      %cst_19 = arith.constant 0.000000e+00 : f32
      %25 = vector.broadcast %cst_19 : f32 to vector<8x128xf32>
      %c0_20 = arith.constant 0 : index
      %c0_21 = arith.constant 0 : index
      %c0_22 = arith.constant 0 : index
      %26 = vector.load %arg5[%c0_20, %c0_21, %c0_22] : memref<1x8x128xf32, #tpu.memory_space<vmem>>, vector<1x8x128xf32>
      %27 = vector.shape_cast %26 : vector<1x8x128xf32> to vector<8x128xf32>
      %28 = vector.shape_cast %25 : vector<8x128xf32> to vector<1x8x128xf32>
      tpu.vector_store %arg5[%c0_20, %c0_21, %c0_22], %28 {strides = array<i32>} : memref<1x8x128xf32, #tpu.memory_space<vmem>>, vector<1x8x128xf32>,
      %cst_23 = arith.constant 0.000000e+00 : f32
      %29 = vector.broadcast %cst_23 : f32 to vector<8x128xf32>
      %c0_24 = arith.constant 0 : index
      %c0_25 = arith.constant 0 : index
      %c0_26 = arith.constant 0 : index
      %30 = vector.load %arg6[%c0_24, %c0_25, %c0_26] : memref<1x8x128xf32, #tpu.memory_space<vmem>>, vector<1x8x128xf32>
      %31 = vector.shape_cast %30 : vector<1x8x128xf32> to vector<8x128xf32>
      %32 = vector.shape_cast %29 : vector<8x128xf32> to vector<1x8x128xf32>
      tpu.vector_store %arg6[%c0_24, %c0_25, %c0_26], %32 {strides = array<i32>} : memref<1x8x128xf32, #tpu.memory_space<vmem>>, vector<1x8x128xf32>,
    } else {
    }
    %c0 = arith.constant 0 : index
    %c0_1 = arith.constant 0 : index
    %3 = vector.load %arg2[%c0, %c0_1] : memref<16x128xf32, #tpu.memory_space<vmem>>, vector<16x128xf32>
    %c0_2 = arith.constant 0 : index
    %c0_3 = arith.constant 0 : index
    %4 = vector.load %arg3[%c0_2, %c0_3] : memref<16x128xf32, #tpu.memory_space<vmem>>, vector<16x128xf32>
    %c0_4 = arith.constant 0 : index
    %c0_5 = arith.constant 0 : index
    %5 = vector.load %arg4[%c0_4, %c0_5] : memref<16x128xf32, #tpu.memory_space<vmem>>, vector<16x128xf32>
    %6 = arith.subf %3, %4 : vector<16x128xf32>
    %7 = arith.mulf %6, %5 : vector<16x128xf32>
    %8 = math.absf %7 : vector<16x128xf32>
    %c0_6 = arith.constant 0 : index
    %c0_7 = arith.constant 0 : index
    %c0_8 = arith.constant 0 : index
    %9 = vector.load %arg5[%c0_6, %c0_7, %c0_8] : memref<1x8x128xf32, #tpu.memory_space<vmem>>, vector<1x8x128xf32>
    %10 = vector.shape_cast %9 : vector<1x8x128xf32> to vector<8x128xf32>
    %11 = vector.shape_cast %8 : vector<16x128xf32> to vector<2x8x128xf32>
    %cst = arith.constant dense<0.000000e+00> : vector<8x128xf32>
    %12 = vector.multi_reduction <add>, %11, %cst [0] : vector<2x8x128xf32> to vector<8x128xf32>
    %13 = arith.addf %10, %12 : vector<8x128xf32>
    %c0_9 = arith.constant 0 : index
    %c0_10 = arith.constant 0 : index
    %c0_11 = arith.constant 0 : index
    %14 = vector.load %arg5[%c0_9, %c0_10, %c0_11] : memref<1x8x128xf32, #tpu.memory_space<vmem>>, vector<1x8x128xf32>
    %15 = vector.shape_cast %14 : vector<1x8x128xf32> to vector<8x128xf32>
    %16 = vector.shape_cast %13 : vector<8x128xf32> to vector<1x8x128xf32>
    tpu.vector_store %arg5[%c0_9, %c0_10, %c0_11], %16 {strides = array<i32>} : memref<1x8x128xf32, #tpu.memory_space<vmem>>, vector<1x8x128xf32>,
    %c0_12 = arith.constant 0 : index
    %c0_13 = arith.constant 0 : index
    %c0_14 = arith.constant 0 : index
    %17 = vector.load %arg6[%c0_12, %c0_13, %c0_14] : memref<1x8x128xf32, #tpu.memory_space<vmem>>, vector<1x8x128xf32>
    %18 = vector.shape_cast %17 : vector<1x8x128xf32> to vector<8x128xf32>
    %19 = vector.shape_cast %5 : vector<16x128xf32> to vector<2x8x128xf32>
    %cst_15 = arith.constant dense<0.000000e+00> : vector<8x128xf32>
    %20 = vector.multi_reduction <add>, %19, %cst_15 [0] : vector<2x8x128xf32> to vector<8x128xf32>
    %21 = arith.addf %18, %20 : vector<8x128xf32>
    %c0_16 = arith.constant 0 : index
    %c0_17 = arith.constant 0 : index
    %c0_18 = arith.constant 0 : index
    %22 = vector.load %arg6[%c0_16, %c0_17, %c0_18] : memref<1x8x128xf32, #tpu.memory_space<vmem>>, vector<1x8x128xf32>
    %23 = vector.shape_cast %22 : vector<1x8x128xf32> to vector<8x128xf32>
    %24 = vector.shape_cast %21 : vector<8x128xf32> to vector<1x8x128xf32>
    tpu.vector_store %arg6[%c0_16, %c0_17, %c0_18], %24 {strides = array<i32>} : memref<1x8x128xf32, #tpu.memory_space<vmem>>, vector<1x8x128xf32>,
    return
  }
  func.func @transform_0(%arg0: i32, %arg1: i32) -> (i32, i32) {
    %c1_i32 = arith.constant 1 : i32
    %0 = arith.muli %arg0, %c1_i32 : i32
    %1 = arith.addi %0, %arg1 : i32
    %c0_i32 = arith.constant 0 : i32
    %c0_i32_0 = arith.constant 0 : i32
    return %1, %c0_i32 : i32, i32
  }
  func.func @transform_1(%arg0: i32, %arg1: i32) -> (i32, i32) {
    %c1_i32 = arith.constant 1 : i32
    %0 = arith.muli %arg0, %c1_i32 : i32
    %1 = arith.addi %0, %arg1 : i32
    %c0_i32 = arith.constant 0 : i32
    %c0_i32_0 = arith.constant 0 : i32
    return %1, %c0_i32 : i32, i32
  }
  func.func @transform_2(%arg0: i32, %arg1: i32) -> (i32, i32) {
    %c1_i32 = arith.constant 1 : i32
    %0 = arith.muli %arg0, %c1_i32 : i32
    %1 = arith.addi %0, %arg1 : i32
    %c0_i32 = arith.constant 0 : i32
    %c0_i32_0 = arith.constant 0 : i32
    return %1, %c0_i32 : i32, i32
  }
  func.func @transform_3(%arg0: i32, %arg1: i32) -> (i32, i32, i32) {
    %c0_i32 = arith.constant 0 : i32
    %c0_i32_0 = arith.constant 0 : i32
    %c0_i32_1 = arith.constant 0 : i32
    return %arg0, %c0_i32, %c0_i32_0 : i32, i32, i32
  }
  func.func @transform_4(%arg0: i32, %arg1: i32) -> (i32, i32, i32) {
    %c0_i32 = arith.constant 0 : i32
    %c0_i32_0 = arith.constant 0 : i32
    %c0_i32_1 = arith.constant 0 : i32
    return %arg0, %c0_i32, %c0_i32_0 : i32, i32, i32
  }
}

</mosaic_0001>

<llo_original>
// kernel: tpu_custom_call.1
$region0: #{tpu_custom_call.1}
  #allocation0 [shape = 'u32[]', space=smem, size = 0x4, offset = 0x4, fixed_abs, tag = 'smem constant byte address 0x4 - core index']
  #allocation1 [shape = 'u32[144,128]{1,0:T(1,128)}', space=vmem, size = 0x12000, scoped, tag = 'internal scratch']
  %s0 = inlined_call_operand.hbm [shape: f32[16,128], index: 0, kind: input, shape index: {}]
  %s1 = inlined_call_operand.hbm [shape: f32[16,128], index: 1, kind: input, shape index: {}]
  %s2 = inlined_call_operand.hbm [shape: f32[16,128], index: 2, kind: input, shape index: {}]
  %s3 = inlined_call_operand.hbm [shape: f32[1,8,128], index: 3, kind: output, shape index: {0}]
  %s4 = inlined_call_operand.hbm [shape: f32[1,8,128], index: 4, kind: output, shape index: {1}]
  %5 = xla_tuple %s3, %s4
  %s6 = sld [smem:[#allocation0]]
  $region46: #{tpu_custom_call.1} parent=0
    _
  %s8 = ssub.s32 1, %s6
  %s9 = scalar_select 0, %s8, %s6
  $region1: #{tpu_custom_call.1} parent=0
    #allocation2 [shape = 'u8[8192]{0}', space=vmem, size = 0x2000, scoped, tag = 'input window, operand 0, single buffered']
    #allocation3 [shape = 's32[1]{0}', space=sflag, size = 0x4, scoped, tag = 'scoped memory for tpu_custom_call.1']
    #allocation4 [shape = 's32[1]{0}', space=sflag, size = 0x4, scoped, tag = 'scoped memory for tpu_custom_call.1']
    #allocation5 [shape = 'u8[8192]{0}', space=vmem, size = 0x2000, scoped, tag = 'input window, operand 1, single buffered']
    #allocation6 [shape = 's32[1]{0}', space=sflag, size = 0x4, scoped, tag = 'scoped memory for tpu_custom_call.1']
    #allocation7 [shape = 'u8[8192]{0}', space=vmem, size = 0x2000, scoped, tag = 'input window, operand 2, single buffered']
    #allocation8 [shape = 'u8[4096]{0}', space=vmem, size = 0x1000, scoped, tag = 'output window, operand 0, single buffered']
    #allocation9 [shape = 'u8[4096]{0}', space=vmem, size = 0x1000, scoped, tag = 'output window, operand 1, single buffered']
    #allocation10 [shape = 's32[1]{0}', space=sflag, size = 0x4, scoped, tag = 'scoped memory for tpu_custom_call.1']
    %10 = vsyncpa [#allocation3], 0
    %11 = vsyncpa [#allocation6], 0
    %12 = vsyncpa [#allocation4], 0
    %13 = vsyncpa [#allocation10], 0
    // Predicated region
    $region2: #{tpu_custom_call.1} parent=1 // pred_check
      _
    $region3: #{tpu_custom_call.1} parent=1 // pred_check_branch
      %15 = sbr.rel (0) target = $region5
    $region4: #{tpu_custom_call.1} parent=1 // pred_region
      %s16 = sadd.s32 0, 0
      %s17 = smul.u32 2, %s16
      %s19 = ssub.s32 256, 256
      %20 = vsyncadd [#allocation3], %s19
      %s21 = smul.addr %s17, 128
      %s22 = scalar_lea.hbm %s0, %s21
      %s23 = sshll.u32 [#allocation2], 4
      %s24 = int_to_ptr.vmem [resolvable:$true] %s23
      %29 = dma.hbm_to_vmem [thread:$0]  %s22, 256, %s24, [#allocation3], 128, 128, 8
    $region5: #{tpu_custom_call.1} parent=1 // pred_fallthru
      _
    // Predicated region
    $region6: #{tpu_custom_call.1} parent=1 // pred_check
      _
    $region7: #{tpu_custom_call.1} parent=1 // pred_check_branch
      %31 = sbr.rel (0) target = $region9
    $region8: #{tpu_custom_call.1} parent=1 // pred_region
      %s32 = sadd.s32 0, 0
      %s33 = smul.u32 2, %s32
      %s35 = ssub.s32 256, 256
      %36 = vsyncadd [#allocation6], %s35
      %s37 = smul.addr %s33, 128
      %s38 = scalar_lea.hbm %s1, %s37
      %s39 = sshll.u32 [#allocation5], 4
      %s40 = int_to_ptr.vmem [resolvable:$true] %s39
      %45 = dma.hbm_to_vmem [thread:$0]  %s38, 256, %s40, [#allocation6], 128, 128, 8
    $region9: #{tpu_custom_call.1} parent=1 // pred_fallthru
      _
    // Predicated region
    $region10: #{tpu_custom_call.1} parent=1 // pred_check
      _
    $region11: #{tpu_custom_call.1} parent=1 // pred_check_branch
      %47 = sbr.rel (0) target = $region13
    $region12: #{tpu_custom_call.1} parent=1 // pred_region
      %s48 = sadd.s32 0, 0
      %s49 = smul.u32 2, %s48
      %s51 = ssub.s32 256, 256
      %52 = vsyncadd [#allocation6], %s51
      %s53 = smul.addr %s49, 128
      %s54 = scalar_lea.hbm %s2, %s53
      %s55 = sshll.u32 [#allocation7], 4
      %s56 = int_to_ptr.vmem [resolvable:$true] %s55
      %61 = dma.hbm_to_vmem [thread:$0]  %s54, 256, %s56, [#allocation6], 128, 128, 8
    $region13: #{tpu_custom_call.1} parent=1 // pred_fallthru
      _
    // Predicated region
    $region14: #{tpu_custom_call.1} parent=1 // pred_check
      _
    $region15: #{tpu_custom_call.1} parent=1 // pred_check_branch
      %63 = sbr.rel (0) target = $region17
    $region16: #{tpu_custom_call.1} parent=1 // pred_region
      %64 = dma.done [#allocation3], 256
    $region17: #{tpu_custom_call.1} parent=1 // pred_fallthru
      _
    // Predicated region
    $region18: #{tpu_custom_call.1} parent=1 // pred_check
      _
    $region19: #{tpu_custom_call.1} parent=1 // pred_check_branch
      %66 = sbr.rel (0) target = $region21
    $region20: #{tpu_custom_call.1} parent=1 // pred_region
      %67 = dma.done [#allocation6], 256
    $region21: #{tpu_custom_call.1} parent=1 // pred_fallthru
      _
    // Predicated region
    $region22: #{tpu_custom_call.1} parent=1 // pred_check
      _
    $region23: #{tpu_custom_call.1} parent=1 // pred_check_branch
      %69 = sbr.rel (0) target = $region25
    $region24: #{tpu_custom_call.1} parent=1 // pred_region
      %70 = dma.done [#allocation6], 256
    $region25: #{tpu_custom_call.1} parent=1 // pred_fallthru
      _
    %s71 = sadd.s32 0, 0
    %s72 = smul.u32 2, %s71
    %s73 = sadd.s32 0, 0
    %s74 = smul.u32 2, %s73
    %s75 = sadd.s32 0, 0
    %s76 = smul.u32 2, %s75
    %p77 = scmp.eq.s32.totalorder 0, 0
    // Predicated region
    $region26: #{tpu_custom_call.1} parent=1 // pred_check
      %p78 = pneg %p77
    $region27: #{tpu_custom_call.1} parent=1 // pred_check_branch
      %80 = sbr.rel (%p78) target = $region29
    $region28: #{tpu_custom_call.1} parent=1 // pred_region
      %81 = vst [vmem:[#allocation8] sm:$0xff] 0.0
      %82 = vst [vmem:[#allocation9] sm:$0xff] 0.0
    $region29: #{tpu_custom_call.1} parent=1 // pred_fallthru
      _
    %v83 = vld [vmem:[#allocation2] sm:$0xff]
    %v84 = vld [vmem:[#allocation2 + $0x8] sm:$0xff]
    %v85 = vld [vmem:[#allocation5] sm:$0xff]
    %v86 = vld [vmem:[#allocation5 + $0x8] sm:$0xff]
    %v87 = vld [vmem:[#allocation7] sm:$0xff]
    %v88 = vld [vmem:[#allocation7 + $0x8] sm:$0xff]
    %v89 = vsub.f32 %v83, %v85
    %v90 = vsub.f32 %v84, %v86
    %v91 = vmul.f32 %v89, %v87
    %v92 = vmul.f32 %v90, %v88
    %v93 = vand.u32 2147483647, %v91
    %v94 = vand.u32 2147483647, %v92
    %v95 = vld [vmem:[#allocation8] sm:$0xff]
    %v96 = vadd.f32 %v93, %v94
    %v97 = vadd.f32 %v95, %v96
    %98 = vst [vmem:[#allocation8] sm:$0xff] %v97
    %v99 = vld [vmem:[#allocation9] sm:$0xff]
    %v100 = vadd.f32 %v87, %v88
    %v101 = vadd.f32 %v99, %v100
    %102 = vst [vmem:[#allocation9] sm:$0xff] %v101
    // Predicated region
    $region30: #{tpu_custom_call.1} parent=1 // pred_check
      _
    $region31: #{tpu_custom_call.1} parent=1 // pred_check_branch
      %104 = sbr.rel (0) target = $region33
    $region32: #{tpu_custom_call.1} parent=1 // pred_region
      %s106 = ssub.s32 128, 128
      %107 = vsyncadd [#allocation4], %s106
      %s109 = sshll.u32 [#allocation8], 4
      %s110 = int_to_ptr.vmem [resolvable:$true] %s109
      %112 = dma.vmem_to_hbm [thread:$0]  %s110, 128, %s3, [#allocation4]
    $region33: #{tpu_custom_call.1} parent=1 // pred_fallthru
      _
    // Predicated region
    $region34: #{tpu_custom_call.1} parent=1 // pred_check
      _
    $region35: #{tpu_custom_call.1} parent=1 // pred_check_branch
      %114 = sbr.rel (0) target = $region37
    $region36: #{tpu_custom_call.1} parent=1 // pred_region
      %s116 = ssub.s32 128, 128
      %117 = vsyncadd [#allocation10], %s116
      %s119 = sshll.u32 [#allocation9], 4
      %s120 = int_to_ptr.vmem [resolvable:$true] %s119
      %122 = dma.vmem_to_hbm [thread:$0]  %s120, 128, %s4, [#allocation10]
    $region37: #{tpu_custom_call.1} parent=1 // pred_fallthru
      _
    // Predicated region
    $region38: #{tpu_custom_call.1} parent=1 // pred_check
      _
    $region39: #{tpu_custom_call.1} parent=1 // pred_check_branch
      %124 = sbr.rel (0) target = $region41
    $region40: #{tpu_custom_call.1} parent=1 // pred_region
      %125 = dma.done [#allocation4], 128
    $region41: #{tpu_custom_call.1} parent=1 // pred_fallthru
      _
    // Predicated region
    $region42: #{tpu_custom_call.1} parent=1 // pred_check
      _
    $region43: #{tpu_custom_call.1} parent=1 // pred_check_branch
      %127 = sbr.rel (0) target = $region45
    $region44: #{tpu_custom_call.1} parent=1 // pred_region
      %128 = dma.done [#allocation10], 128
    $region45: #{tpu_custom_call.1} parent=1 // pred_fallthru
      _
    %129 = vsyncpa [#allocation3], 1
    %130 = vsyncpa [#allocation6], 1
    %131 = vsyncpa [#allocation4], 1
    %132 = vsyncpa [#allocation10], 1

</llo_original>
